<compile_context>
chip_gen: v7x
topology: tpu7x:2x2x1
jax: 0.10.0
libtpu: 0.0.40
codegen_flags: <defaults>
</compile_context>

<pallas_src>
import functools

import jax
import jax.numpy as jnp
from jax import lax
from jax.experimental import pallas as pl
from jax.experimental.pallas import tpu as pltpu

LANES = 128
SUBLANES = 8


@functools.lru_cache(maxsize=1)
def _device_config():
    """(max_block_rows_f32, num_shards, vmem_limit_bytes) for this chip."""
    kind = ""
    try:
        kind = jax.devices()[0].device_kind.lower()
    except Exception:  # config heuristic only, never correctness
        pass
    if "v7" in kind:
        # 2 TensorCores / 64 MiB physical VMEM: split the reduction, cap tiles.
        return 8192, 2, 48 * 1024 * 1024
    if "v6" in kind or "v5" in kind:
        # 1 TensorCore / 128 MiB physical VMEM: big tiles, no shard split.
        return 8192, 1, 64 * 1024 * 1024
    # Unknown / older chip: conservative tile, default scoped-VMEM limit.
    return 2048, 1, None


def _mse_partial_kernel(x_ref, t_ref, out_ref, *, rows, block_rows,
                        steps_per_shard, needs_mask):
    """Accumulate this shard's sum((x - t)^2) into a resident (1,8,128) block.

    Grid = (num_shards, steps_per_shard); axis 1 is the reduction axis and the
    output block (index = shard id) stays resident in VMEM across it.
    """
    p = pl.program_id(0)
    i = pl.program_id(1)

    @pl.when(i == 0)
    def _():
        out_ref[...] = jnp.zeros_like(out_ref)

    def accumulate(d):
        sq = d * d
        # Vreg-aligned reshape (layout-preserving, free) + pure-VPU tree add
        # down to a single (8,128) vreg -> one acc load + one store per step.
        out_ref[...] += jnp.sum(sq.reshape(-1, SUBLANES, LANES),
                                axis=0).reshape(1, SUBLANES, LANES)

    def full_block():
        d = x_ref[...].astype(jnp.float32) - t_ref[...].astype(jnp.float32)
        accumulate(d)

    if not needs_mask:
        # Hot path: every grid step is a full, real block -> no mask at all.
        full_block()
    else:
        row0 = (p * steps_per_shard + i) * block_rows
        is_full = row0 + block_rows <= rows
        is_partial = jnp.logical_and(row0 < rows, jnp.logical_not(is_full))

        pl.when(is_full)(full_block)

        @pl.when(is_partial)
        def _():
            # Only the single partial block pays for the mask.  Rows past the
            # end of the array hold unspecified data; zero BEFORE squaring.
            row_ids = row0 + lax.broadcasted_iota(
                jnp.int32, (block_rows, LANES), 0)
            d = (x_ref[...].astype(jnp.float32)
                 - t_ref[...].astype(jnp.float32))
            d = jnp.where(row_ids < rows, d, 0.0)
            accumulate(d)
        # Overhang steps (row0 >= rows, clamped index_map): skip all VPU work.


def _sum_sq_diff(x2d, t2d, *, max_block_rows=None, num_shards=None,
                 vmem_limit_bytes=None):
    """x2d, t2d: (rows, 128) with rows % 8 == 0, native dtype.

    Returns the scalar f32 sum of (x - t)^2 over the whole array.
    """
    rows = x2d.shape[0]
    cfg_rows, cfg_shards, cfg_vmem = _device_config()
    if max_block_rows is None:
        max_block_rows = cfg_rows
        if x2d.dtype.itemsize <= 2:
            max_block_rows *= 2   # sub-32-bit inputs stream at half the bytes
    if num_shards is None:
        num_shards = cfg_shards
    if vmem_limit_bytes is None:
        vmem_limit_bytes = cfg_vmem

    block_rows = min(rows, max_block_rows)          # both are multiples of 8
    total_blocks = pl.cdiv(rows, block_rows)
    num_shards = max(1, min(num_shards, total_blocks))
    steps_per_shard = pl.cdiv(total_blocks, num_shards)

    has_partial = (rows % block_rows) != 0
    has_overhang = (num_shards * steps_per_shard) != total_blocks
    needs_mask = has_partial or has_overhang

    if has_overhang:
        # Overhang steps re-read the last real block (kernel skips compute).
        def in_map(p, i):
            return (jnp.minimum(p * steps_per_shard + i, total_blocks - 1), 0)
    else:
        def in_map(p, i):
            return (p * steps_per_shard + i, 0)

    kernel = functools.partial(
        _mse_partial_kernel, rows=rows, block_rows=block_rows,
        steps_per_shard=steps_per_shard, needs_mask=needs_mask)

    cp_kwargs = dict(dimension_semantics=("parallel", "arbitrary"))
    if vmem_limit_bytes is not None:
        cp_kwargs["vmem_limit_bytes"] = vmem_limit_bytes

    partials = pl.pallas_call(
        kernel,
        out_shape=jax.ShapeDtypeStruct((num_shards, SUBLANES, LANES),
                                       jnp.float32),
        grid_spec=pltpu.PrefetchScalarGridSpec(
            num_scalar_prefetch=0,
            grid=(num_shards, steps_per_shard),
            in_specs=[
                pl.BlockSpec((block_rows, LANES), in_map),
                pl.BlockSpec((block_rows, LANES), in_map),
            ],
            out_specs=pl.BlockSpec((1, SUBLANES, LANES),
                                   lambda p, i: (p, 0, 0)),
        ),
        compiler_params=pltpu.CompilerParams(**cp_kwargs),
    )(x2d, t2d)
    return jnp.sum(partials)


def content_loss_forward(x, target, *, max_block_rows=None, num_shards=None):
    """Pallas equivalent of ContentLoss.forward: returns (input, mse_loss)."""
    assert x.shape == target.shape, "input/target shape mismatch"
    n_elems = x.size

    xf = x.reshape(-1)
    tf = target.reshape(-1)
    chunk = SUBLANES * LANES                      # 1024
    rem = n_elems % chunk
    if rem:
        # Rare path: pad BOTH with matching zeros (tail contributes 0 to the
        # sum) so every in-kernel block is (8,128)-aligned without masking the
        # pad region.  Typical conv-feature sizes take the free reshape path.
        pad = chunk - rem
        xf = jnp.pad(xf, (0, pad))
        tf = jnp.pad(tf, (0, pad))
    rows = xf.size // LANES
    x2d = xf.reshape(rows, LANES)
    t2d = tf.reshape(rows, LANES)

    sq_sum = _sum_sq_diff(x2d, t2d, max_block_rows=max_block_rows,
                          num_shards=num_shards)
    loss = sq_sum / jnp.float32(n_elems)          # mse_loss reduction='mean'
    # forward() returns its input unchanged; loss is the value the torch
    # module stashes on self.loss.
    return x, loss


if __name__ == "__main__":
    key = jax.random.PRNGKey(0)
    k1, k2, k3, k4, k5, k6 = jax.random.split(key, 6)

    # Small NCHW feature map, consistent with a conv-feature content loss.
    shape = (2, 4, 16, 16)
    x = jax.random.normal(k1, shape, dtype=jnp.float32)
    target = jax.random.normal(k2, shape, dtype=jnp.float32)  # "detached"

    out, loss = content_loss_forward(x, target)
    out = jax.block_until_ready(out)
    loss = jax.block_until_ready(loss)
    ref_loss = jnp.mean((x - target) ** 2)
    assert jnp.allclose(loss, ref_loss, rtol=1e-5, atol=1e-6), (loss, ref_loss)
    assert jnp.array_equal(out, x), "forward must return input unchanged"

    # bf16 feature map: exercises the half-bytes streaming path.
    shape2 = (8, 8, 96, 96)                       # 589824 elems -> 4608 rows
    xb = jax.random.normal(k3, shape2, dtype=jnp.bfloat16)
    tb = jax.random.normal(k4, shape2, dtype=jnp.bfloat16)
    _, loss2 = content_loss_forward(xb, tb)
    loss2 = jax.block_until_ready(loss2)
    ref2 = jnp.mean((xb.astype(jnp.float32) - tb.astype(jnp.float32)) ** 2)
    assert jnp.allclose(loss2, ref2, rtol=1e-4, atol=1e-6), (loss2, ref2)

    # Force a tiny tile + 2 shards to exercise the multi-block, partial-block
    # (masked) and overhang-skip paths regardless of the device's default
    # config.  14400 elems -> pad to 15360 -> 120 rows; block 48 -> 3 blocks.
    shape3 = (3, 5, 24, 40)
    xf3 = jax.random.normal(k5, shape3, dtype=jnp.float32)
    tf3 = jax.random.normal(k6, shape3, dtype=jnp.float32)
    _, loss3 = content_loss_forward(xf3, tf3, max_block_rows=48, num_shards=2)
    loss3 = jax.block_until_ready(loss3)
    ref3 = jnp.mean((xf3 - tf3) ** 2)
    assert jnp.allclose(loss3, ref3, rtol=1e-5, atol=1e-6), (loss3, ref3)

    print("KERNEL_OK")
</pallas_src>

<mosaic_0001>
module attributes {stable_mosaic.version = 11 : i64} {
  func.func @_mse_partial_kernel(%arg0: i32, %arg1: i32, %arg2: memref<16x128xf32, #tpu.memory_space<vmem>>, %arg3: memref<16x128xf32, #tpu.memory_space<vmem>>, %arg4: memref<1x8x128xf32, #tpu.memory_space<vmem>>) attributes {dimension_semantics = [#tpu.dimension_semantics<parallel>, #tpu.dimension_semantics<arbitrary>], iteration_bounds = array<i64: 1, 1>, scalar_prefetch = 0 : i64, scratch_operands = 0 : i64, tpu.core_type = #tpu.core_type<tc>, window_params = [{transform_indices = @transform_0, window_bounds = array<i64: 16, 128>}, {transform_indices = @transform_1, window_bounds = array<i64: 16, 128>}, {transform_indices = @transform_2, window_bounds = array<i64: 1, 8, 128>}]} {
    %c0_i32 = arith.constant 0 : i32
    %0 = arith.cmpi eq, %arg1, %c0_i32 : i32
    %1 = arith.extui %0 : i1 to i32
    %c0_i32_0 = arith.constant 0 : i32
    %2 = arith.cmpi ne, %1, %c0_i32_0 : i32
    scf.if %2 {
      %cst_10 = arith.constant 0.000000e+00 : f32
      %13 = vector.broadcast %cst_10 : f32 to vector<1x8x128xf32>
      %c0_11 = arith.constant 0 : index
      %c0_12 = arith.constant 0 : index
      %c0_13 = arith.constant 0 : index
      %14 = vector.load %arg4[%c0_11, %c0_12, %c0_13] : memref<1x8x128xf32, #tpu.memory_space<vmem>>, vector<1x8x128xf32>
      tpu.vector_store %arg4[%c0_11, %c0_12, %c0_13], %13 {strides = array<i32>} : memref<1x8x128xf32, #tpu.memory_space<vmem>>, vector<1x8x128xf32>,
    } else {
    }
    %c0 = arith.constant 0 : index
    %c0_1 = arith.constant 0 : index
    %3 = vector.load %arg2[%c0, %c0_1] : memref<16x128xf32, #tpu.memory_space<vmem>>, vector<16x128xf32>
    %c0_2 = arith.constant 0 : index
    %c0_3 = arith.constant 0 : index
    %4 = vector.load %arg3[%c0_2, %c0_3] : memref<16x128xf32, #tpu.memory_space<vmem>>, vector<16x128xf32>
    %5 = arith.subf %3, %4 : vector<16x128xf32>
    %6 = arith.mulf %5, %5 : vector<16x128xf32>
    %c0_4 = arith.constant 0 : index
    %c0_5 = arith.constant 0 : index
    %c0_6 = arith.constant 0 : index
    %7 = vector.load %arg4[%c0_4, %c0_5, %c0_6] : memref<1x8x128xf32, #tpu.memory_space<vmem>>, vector<1x8x128xf32>
    %8 = vector.shape_cast %6 : vector<16x128xf32> to vector<2x8x128xf32>
    %cst = arith.constant dense<0.000000e+00> : vector<8x128xf32>
    %9 = vector.multi_reduction <add>, %8, %cst [0] : vector<2x8x128xf32> to vector<8x128xf32>
    %10 = vector.shape_cast %9 : vector<8x128xf32> to vector<1x8x128xf32>
    %11 = arith.addf %7, %10 : vector<1x8x128xf32>
    %c0_7 = arith.constant 0 : index
    %c0_8 = arith.constant 0 : index
    %c0_9 = arith.constant 0 : index
    %12 = vector.load %arg4[%c0_7, %c0_8, %c0_9] : memref<1x8x128xf32, #tpu.memory_space<vmem>>, vector<1x8x128xf32>
    tpu.vector_store %arg4[%c0_7, %c0_8, %c0_9], %11 {strides = array<i32>} : memref<1x8x128xf32, #tpu.memory_space<vmem>>, vector<1x8x128xf32>,
    return
  }
  func.func @transform_0(%arg0: i32, %arg1: i32) -> (i32, i32) {
    %c1_i32 = arith.constant 1 : i32
    %0 = arith.muli %arg0, %c1_i32 : i32
    %1 = arith.addi %0, %arg1 : i32
    %c0_i32 = arith.constant 0 : i32
    %c0_i32_0 = arith.constant 0 : i32
    return %1, %c0_i32 : i32, i32
  }
  func.func @transform_1(%arg0: i32, %arg1: i32) -> (i32, i32) {
    %c1_i32 = arith.constant 1 : i32
    %0 = arith.muli %arg0, %c1_i32 : i32
    %1 = arith.addi %0, %arg1 : i32
    %c0_i32 = arith.constant 0 : i32
    %c0_i32_0 = arith.constant 0 : i32
    return %1, %c0_i32 : i32, i32
  }
  func.func @transform_2(%arg0: i32, %arg1: i32) -> (i32, i32, i32) {
    %c0_i32 = arith.constant 0 : i32
    %c0_i32_0 = arith.constant 0 : i32
    %c0_i32_1 = arith.constant 0 : i32
    return %arg0, %c0_i32, %c0_i32_0 : i32, i32, i32
  }
}

</mosaic_0001>

<llo_original>
// kernel: tpu_custom_call.1
$region0: #{tpu_custom_call.1}
  #allocation0 [shape = 'u32[]', space=smem, size = 0x4, offset = 0x4, fixed_abs, tag = 'smem constant byte address 0x4 - core index']
  #allocation1 [shape = 'u32[144,128]{1,0:T(1,128)}', space=vmem, size = 0x12000, scoped, tag = 'internal scratch']
  %s0 = inlined_call_operand.hbm [shape: f32[16,128], index: 0, kind: input, shape index: {}]
  %s1 = inlined_call_operand.hbm [shape: f32[16,128], index: 1, kind: input, shape index: {}]
  %s2 = inlined_call_operand.hbm [shape: f32[1,8,128], index: 2, kind: output, shape index: {}]
  %s3 = sld [smem:[#allocation0]]
  $region30: #{tpu_custom_call.1} parent=0
    _
  %s5 = ssub.s32 1, %s3
  %s6 = scalar_select 0, %s5, %s3
  $region1: #{tpu_custom_call.1} parent=0
    #allocation2 [shape = 'u8[8192]{0}', space=vmem, size = 0x2000, scoped, tag = 'input window, operand 0, single buffered']
    #allocation3 [shape = 's32[1]{0}', space=sflag, size = 0x4, scoped, tag = 'scoped memory for tpu_custom_call.1']
    #allocation4 [shape = 's32[1]{0}', space=sflag, size = 0x4, scoped, tag = 'scoped memory for tpu_custom_call.1']
    #allocation5 [shape = 'u8[8192]{0}', space=vmem, size = 0x2000, scoped, tag = 'input window, operand 1, single buffered']
    #allocation6 [shape = 's32[1]{0}', space=sflag, size = 0x4, scoped, tag = 'scoped memory for tpu_custom_call.1']
    #allocation7 [shape = 'u8[4096]{0}', space=vmem, size = 0x1000, scoped, tag = 'output window, operand 0, single buffered']
    %7 = vsyncpa [#allocation3], 0
    %8 = vsyncpa [#allocation6], 0
    %9 = vsyncpa [#allocation4], 0
    // Predicated region
    $region2: #{tpu_custom_call.1} parent=1 // pred_check
      _
    $region3: #{tpu_custom_call.1} parent=1 // pred_check_branch
      %11 = sbr.rel (0) target = $region5
    $region4: #{tpu_custom_call.1} parent=1 // pred_region
      %s12 = sadd.s32 0, 0
      %s13 = smul.u32 2, %s12
      %s15 = ssub.s32 256, 256
      %16 = vsyncadd [#allocation3], %s15
      %s17 = smul.addr %s13, 128
      %s18 = scalar_lea.hbm %s0, %s17
      %s19 = sshll.u32 [#allocation2], 4
      %s20 = int_to_ptr.vmem [resolvable:$true] %s19
      %25 = dma.hbm_to_vmem [thread:$0]  %s18, 256, %s20, [#allocation3], 128, 128, 8
    $region5: #{tpu_custom_call.1} parent=1 // pred_fallthru
      _
    // Predicated region
    $region6: #{tpu_custom_call.1} parent=1 // pred_check
      _
    $region7: #{tpu_custom_call.1} parent=1 // pred_check_branch
      %27 = sbr.rel (0) target = $region9
    $region8: #{tpu_custom_call.1} parent=1 // pred_region
      %s28 = sadd.s32 0, 0
      %s29 = smul.u32 2, %s28
      %s31 = ssub.s32 256, 256
      %32 = vsyncadd [#allocation6], %s31
      %s33 = smul.addr %s29, 128
      %s34 = scalar_lea.hbm %s1, %s33
      %s35 = sshll.u32 [#allocation5], 4
      %s36 = int_to_ptr.vmem [resolvable:$true] %s35
      %41 = dma.hbm_to_vmem [thread:$0]  %s34, 256, %s36, [#allocation6], 128, 128, 8
    $region9: #{tpu_custom_call.1} parent=1 // pred_fallthru
      _
    // Predicated region
    $region10: #{tpu_custom_call.1} parent=1 // pred_check
      _
    $region11: #{tpu_custom_call.1} parent=1 // pred_check_branch
      %43 = sbr.rel (0) target = $region13
    $region12: #{tpu_custom_call.1} parent=1 // pred_region
      %44 = dma.done [#allocation3], 256
    $region13: #{tpu_custom_call.1} parent=1 // pred_fallthru
      _
    // Predicated region
    $region14: #{tpu_custom_call.1} parent=1 // pred_check
      _
    $region15: #{tpu_custom_call.1} parent=1 // pred_check_branch
      %46 = sbr.rel (0) target = $region17
    $region16: #{tpu_custom_call.1} parent=1 // pred_region
      %47 = dma.done [#allocation6], 256
    $region17: #{tpu_custom_call.1} parent=1 // pred_fallthru
      _
    %s48 = sadd.s32 0, 0
    %s49 = smul.u32 2, %s48
    %s50 = sadd.s32 0, 0
    %s51 = smul.u32 2, %s50
    %p52 = scmp.eq.s32.totalorder 0, 0
    // Predicated region
    $region18: #{tpu_custom_call.1} parent=1 // pred_check
      %p53 = pneg %p52
    $region19: #{tpu_custom_call.1} parent=1 // pred_check_branch
      %55 = sbr.rel (%p53) target = $region21
    $region20: #{tpu_custom_call.1} parent=1 // pred_region
      %56 = vst [vmem:[#allocation7] sm:$0xff] 0.0
    $region21: #{tpu_custom_call.1} parent=1 // pred_fallthru
      _
    %v57 = vld [vmem:[#allocation2] sm:$0xff]
    %v58 = vld [vmem:[#allocation2 + $0x8] sm:$0xff]
    %v59 = vld [vmem:[#allocation5] sm:$0xff]
    %v60 = vld [vmem:[#allocation5 + $0x8] sm:$0xff]
    %v61 = vsub.f32 %v57, %v59
    %v62 = vsub.f32 %v58, %v60
    %v63 = vmul.f32 %v61, %v61
    %v64 = vmul.f32 %v62, %v62
    %v65 = vld [vmem:[#allocation7] sm:$0xff]
    %v66 = vadd.f32 %v63, %v64
    %v67 = vadd.f32 %v65, %v66
    %68 = vst [vmem:[#allocation7] sm:$0xff] %v67
    // Predicated region
    $region22: #{tpu_custom_call.1} parent=1 // pred_check
      _
    $region23: #{tpu_custom_call.1} parent=1 // pred_check_branch
      %70 = sbr.rel (0) target = $region25
    $region24: #{tpu_custom_call.1} parent=1 // pred_region
      %s72 = ssub.s32 128, 128
      %73 = vsyncadd [#allocation4], %s72
      %s75 = sshll.u32 [#allocation7], 4
      %s76 = int_to_ptr.vmem [resolvable:$true] %s75
      %78 = dma.vmem_to_hbm [thread:$0]  %s76, 128, %s2, [#allocation4]
    $region25: #{tpu_custom_call.1} parent=1 // pred_fallthru
      _
    // Predicated region
    $region26: #{tpu_custom_call.1} parent=1 // pred_check
      _
    $region27: #{tpu_custom_call.1} parent=1 // pred_check_branch
      %80 = sbr.rel (0) target = $region29
    $region28: #{tpu_custom_call.1} parent=1 // pred_region
      %81 = dma.done [#allocation4], 128
    $region29: #{tpu_custom_call.1} parent=1 // pred_fallthru
      _
    %82 = vsyncpa [#allocation3], 1
    %83 = vsyncpa [#allocation6], 1
    %84 = vsyncpa [#allocation4], 1

</llo_original>
